<compile_context>
chip_gen: v7x
topology: tpu7x:2x2x1
jax: 0.10.0
libtpu: 0.0.40
codegen_flags: <defaults>
</compile_context>

<pallas_src>
import jax
import jax.numpy as jnp
from jax.experimental import pallas as pl
from jax.experimental.pallas import tpu as pltpu


def _make_dsn_kernel(num, weights):
    """Build the kernel for a fixed modality count and static per-modality weights."""
    weights = tuple(float(w) for w in weights)

    def kernel(*refs):
        labels_ref = refs[0]                 # (bt, 1) int32, VMEM
        logits_refs = refs[1:1 + num]        # num x (bt, C_i), native dtype, VMEM
        out_ref = refs[1 + num]              # (bt, 1) f32, VMEM

        labels = labels_ref[...]             # (bt, 1)
        bt = labels.shape[0]

        acc = jnp.zeros((bt, 1), dtype=jnp.float32)
        for i in range(num):
            # Cast on-chip (DMA stayed in the native dtype).
            logits = logits_refs[i][...].astype(jnp.float32)          # (bt, C)
            c = logits.shape[-1]

            # Numerically-stable log-sum-exp over the class (lane) axis.
            m = jnp.max(logits, axis=-1, keepdims=True)               # (bt, 1)
            lse = jnp.log(jnp.sum(jnp.exp(logits - m), axis=-1, keepdims=True)) + m

            # Fused label gather: iota compare -> select -> lane reduction.
            cls = jax.lax.broadcasted_iota(jnp.int32, (bt, c), 1)     # (bt, C)
            lbl_logit = jnp.sum(jnp.where(cls == labels, logits, 0.0),
                                axis=-1, keepdims=True)               # (bt, 1)

            # Per-sample CE for this modality, weighted on the VPU (static scalar).
            acc = acc + weights[i] * (lse - lbl_logit)

        out_ref[...] = acc

    return kernel


def _pick_block_b(b, c_max, num, block_b=None):
    """Choose a batch tile: divides B, multiple of 8, double-buffered inputs fit VMEM."""
    if block_b is not None and (block_b == b or (b % block_b == 0 and block_b % 8 == 0)):
        return int(block_b)
    if b % 8 != 0:
        # Block equal to the full batch dim is always legal (no (8,128) requirement).
        return b
    # Conservative footprint: f32-equivalent, lane-padded C, double buffered, all modalities.
    bytes_per_row = num * max(c_max, 128) * 4 * 2
    cap = max(8, (8 * 1024 * 1024) // bytes_per_row)
    for t in (1024, 512, 256, 128, 64, 32, 16, 8):
        if t <= b and t <= cap and b % t == 0:
            return t
    return b


def dsn_loss_cls(logits_list, labels, weights=None, reduction="mean",
                 onehot_labels=None, block_b=None):
    """JAX/Pallas equivalent of DSNLoss_cls.forward (criterion='CE').

    logits_list: list of `num` arrays, each [B, C_i] (native dtype, no pre-cast needed).
    labels:      [B] int class ids, or one-hot [B, C].
    weights:     construction-time constants (list/tuple/array of length num).
    """
    num = len(logits_list)
    b = int(logits_list[0].shape[0])
    c = int(logits_list[0].shape[1])

    if weights is None:
        w_list = [1.0] * num
    else:
        w_list = [float(w) for w in list(weights)]
    assert len(w_list) == num, f"num {num}, but weight length {len(w_list)}"

    # One-hot vs. index decision is made *statically* from shapes (the PyTorch module
    # checks labels.max()==1 at runtime, which would force a device sync / break tracing).
    if onehot_labels is None:
        onehot_labels = (labels.ndim == 2 and labels.shape[-1] == c and c != 2)
    if onehot_labels:
        labels_idx = jnp.argmax(labels, axis=-1)
    else:
        labels_idx = labels.reshape(b)
    labels_2d = labels_idx.astype(jnp.int32).reshape(b, 1)

    c_max = max(int(l.shape[1]) for l in logits_list)
    bt = _pick_block_b(b, c_max, num, block_b)
    grid = (b // bt,)

    in_specs = [pl.BlockSpec((bt, 1), lambda i: (i, 0))]           # labels
    for l in logits_list:
        ci = int(l.shape[1])
        in_specs.append(pl.BlockSpec((bt, ci), lambda i: (i, 0)))  # full class row per tile
    out_spec = pl.BlockSpec((bt, 1), lambda i: (i, 0))

    kernel = _make_dsn_kernel(num, w_list)

    per_sample = pl.pallas_call(
        kernel,
        grid=grid,
        in_specs=in_specs,
        out_specs=out_spec,
        out_shape=jax.ShapeDtypeStruct((b, 1), jnp.float32),
        compiler_params=pltpu.CompilerParams(
            dimension_semantics=("parallel",),
            vmem_limit_bytes=32 * 1024 * 1024,
        ),
    )(labels_2d, *logits_list)

    per_sample = per_sample[:, 0]
    if reduction == "mean":
        return jnp.mean(per_sample)
    elif reduction == "sum":
        return jnp.sum(per_sample)
    elif reduction == "none":
        return per_sample
    else:
        raise ValueError(f"unknown reduction: {reduction}")


def _reference(logits_list, labels_idx, weights):
    """Pure-JAX per-sample reference for sanity checking."""
    w = jnp.asarray(weights, jnp.float32)
    per = []
    for l in logits_list:
        logp = jax.nn.log_softmax(l.astype(jnp.float32), axis=-1)
        per.append(-jnp.take_along_axis(
            logp, labels_idx[:, None].astype(jnp.int32), axis=1)[:, 0])
    loss = jnp.stack(per, axis=1)                     # (B, num)
    return jnp.sum(w[None, :] * loss, axis=1)         # (B,)


if __name__ == "__main__":
    key = jax.random.PRNGKey(0)

    # --- Test 1: small f32 logits, index labels, 'mean' reduction -----------------
    num, B, C = 3, 8, 4
    keys = jax.random.split(key, num + 2)
    logits1 = [jax.random.normal(keys[i], (B, C), dtype=jnp.float32) for i in range(num)]
    labels1 = jax.random.randint(keys[num], (B,), 0, C, dtype=jnp.int32)

    out1 = jax.block_until_ready(dsn_loss_cls(logits1, labels1, reduction="mean"))
    ref1 = jnp.mean(_reference(logits1, labels1, jnp.ones((num,), jnp.float32)))
    assert jnp.allclose(out1, ref1, atol=1e-5, rtol=1e-5), (out1, ref1)

    # --- Test 2: bf16 logits, one-hot labels, non-uniform weights, multi-tile grid,
    #             'none' reduction (per-sample losses) -----------------------------
    num2, B2, C2 = 3, 64, 16
    keys2 = jax.random.split(keys[num + 1], num2 + 1)
    logits2 = [jax.random.normal(keys2[i], (B2, C2), dtype=jnp.bfloat16) for i in range(num2)]
    labels_idx2 = jax.random.randint(keys2[num2], (B2,), 0, C2, dtype=jnp.int32)
    labels_onehot2 = jax.nn.one_hot(labels_idx2, C2, dtype=jnp.float32)
    w2 = [0.5, 0.3, 0.2]

    out2 = jax.block_until_ready(
        dsn_loss_cls(logits2, labels_onehot2, weights=w2, reduction="none", block_b=16))
    ref2 = _reference(logits2, labels_idx2, w2)
    assert jnp.allclose(out2, ref2, atol=1e-4, rtol=1e-4), (out2, ref2)

    # --- Test 3: 'sum' reduction path ----------------------------------------------
    out3 = jax.block_until_ready(
        dsn_loss_cls(logits2, labels_idx2, weights=w2, reduction="sum"))
    ref3 = jnp.sum(ref2)
    assert jnp.allclose(out3, ref3, atol=1e-3, rtol=1e-4), (out3, ref3)

    print("KERNEL_OK")
</pallas_src>

<mosaic_0001>
module attributes {stable_mosaic.version = 11 : i64} {
  func.func @kernel(%arg0: i32, %arg1: memref<8x1xi32, #tpu.memory_space<vmem>>, %arg2: memref<8x4xf32, #tpu.memory_space<vmem>>, %arg3: memref<8x4xf32, #tpu.memory_space<vmem>>, %arg4: memref<8x4xf32, #tpu.memory_space<vmem>>, %arg5: memref<8x1xf32, #tpu.memory_space<vmem>>) attributes {dimension_semantics = [#tpu.dimension_semantics<parallel>], iteration_bounds = array<i64: 1>, scalar_prefetch = 0 : i64, scratch_operands = 0 : i64, tpu.core_type = #tpu.core_type<tc>, window_params = [{transform_indices = @transform_0, window_bounds = array<i64: 8, 1>}, {transform_indices = @transform_1, window_bounds = array<i64: 8, 4>}, {transform_indices = @transform_2, window_bounds = array<i64: 8, 4>}, {transform_indices = @transform_3, window_bounds = array<i64: 8, 4>}, {transform_indices = @transform_4, window_bounds = array<i64: 8, 1>}]} {
    %c0 = arith.constant 0 : index
    %c0_0 = arith.constant 0 : index
    %0 = vector.load %arg1[%c0, %c0_0] : memref<8x1xi32, #tpu.memory_space<vmem>>, vector<8x1xi32>
    %cst = arith.constant 0.000000e+00 : f32
    %1 = vector.broadcast %cst : f32 to vector<8x1xf32>
    %c0_1 = arith.constant 0 : index
    %c0_2 = arith.constant 0 : index
    %2 = vector.load %arg2[%c0_1, %c0_2] : memref<8x4xf32, #tpu.memory_space<vmem>>, vector<8x4xf32>
    %cst_3 = arith.constant dense<0xFF800000> : vector<8xf32>
    %3 = vector.multi_reduction <maximumf>, %2, %cst_3 [1] : vector<8x4xf32> to vector<8xf32>
    %4 = vector.shape_cast %3 : vector<8xf32> to vector<8x1xf32>
    %5 = vector.broadcast %4 : vector<8x1xf32> to vector<8x4xf32>
    %6 = arith.subf %2, %5 : vector<8x4xf32>
    %7 = math.exp %6 : vector<8x4xf32>
    %cst_4 = arith.constant dense<0.000000e+00> : vector<8xf32>
    %8 = vector.multi_reduction <add>, %7, %cst_4 [1] : vector<8x4xf32> to vector<8xf32>
    %9 = vector.shape_cast %8 : vector<8xf32> to vector<8x1xf32>
    %10 = math.log %9 : vector<8x1xf32>
    %11 = arith.addf %10, %4 : vector<8x1xf32>
    %12 = tpu.iota {dimensions = array<i32: 1>} : vector<8x4xi32>
    %13 = vector.broadcast %0 : vector<8x1xi32> to vector<8x4xi32>
    %14 = arith.cmpi eq, %12, %13 : vector<8x4xi32>
    %cst_5 = arith.constant 0.000000e+00 : f32
    %15 = vector.broadcast %cst_5 : f32 to vector<8x4xf32>
    %16 = arith.select %14, %2, %15 : vector<8x4xi1>, vector<8x4xf32>
    %cst_6 = arith.constant dense<0.000000e+00> : vector<8xf32>
    %17 = vector.multi_reduction <add>, %16, %cst_6 [1] : vector<8x4xf32> to vector<8xf32>
    %18 = vector.shape_cast %17 : vector<8xf32> to vector<8x1xf32>
    %19 = arith.subf %11, %18 : vector<8x1xf32>
    %cst_7 = arith.constant 1.000000e+00 : f32
    %20 = vector.broadcast %cst_7 : f32 to vector<8x1xf32>
    %21 = arith.mulf %20, %19 : vector<8x1xf32>
    %22 = arith.addf %1, %21 : vector<8x1xf32>
    %c0_8 = arith.constant 0 : index
    %c0_9 = arith.constant 0 : index
    %23 = vector.load %arg3[%c0_8, %c0_9] : memref<8x4xf32, #tpu.memory_space<vmem>>, vector<8x4xf32>
    %cst_10 = arith.constant dense<0xFF800000> : vector<8xf32>
    %24 = vector.multi_reduction <maximumf>, %23, %cst_10 [1] : vector<8x4xf32> to vector<8xf32>
    %25 = vector.shape_cast %24 : vector<8xf32> to vector<8x1xf32>
    %26 = vector.broadcast %25 : vector<8x1xf32> to vector<8x4xf32>
    %27 = arith.subf %23, %26 : vector<8x4xf32>
    %28 = math.exp %27 : vector<8x4xf32>
    %cst_11 = arith.constant dense<0.000000e+00> : vector<8xf32>
    %29 = vector.multi_reduction <add>, %28, %cst_11 [1] : vector<8x4xf32> to vector<8xf32>
    %30 = vector.shape_cast %29 : vector<8xf32> to vector<8x1xf32>
    %31 = math.log %30 : vector<8x1xf32>
    %32 = arith.addf %31, %25 : vector<8x1xf32>
    %33 = tpu.iota {dimensions = array<i32: 1>} : vector<8x4xi32>
    %34 = vector.broadcast %0 : vector<8x1xi32> to vector<8x4xi32>
    %35 = arith.cmpi eq, %33, %34 : vector<8x4xi32>
    %cst_12 = arith.constant 0.000000e+00 : f32
    %36 = vector.broadcast %cst_12 : f32 to vector<8x4xf32>
    %37 = arith.select %35, %23, %36 : vector<8x4xi1>, vector<8x4xf32>
    %cst_13 = arith.constant dense<0.000000e+00> : vector<8xf32>
    %38 = vector.multi_reduction <add>, %37, %cst_13 [1] : vector<8x4xf32> to vector<8xf32>
    %39 = vector.shape_cast %38 : vector<8xf32> to vector<8x1xf32>
    %40 = arith.subf %32, %39 : vector<8x1xf32>
    %cst_14 = arith.constant 1.000000e+00 : f32
    %41 = vector.broadcast %cst_14 : f32 to vector<8x1xf32>
    %42 = arith.mulf %41, %40 : vector<8x1xf32>
    %43 = arith.addf %22, %42 : vector<8x1xf32>
    %c0_15 = arith.constant 0 : index
    %c0_16 = arith.constant 0 : index
    %44 = vector.load %arg4[%c0_15, %c0_16] : memref<8x4xf32, #tpu.memory_space<vmem>>, vector<8x4xf32>
    %cst_17 = arith.constant dense<0xFF800000> : vector<8xf32>
    %45 = vector.multi_reduction <maximumf>, %44, %cst_17 [1] : vector<8x4xf32> to vector<8xf32>
    %46 = vector.shape_cast %45 : vector<8xf32> to vector<8x1xf32>
    %47 = vector.broadcast %46 : vector<8x1xf32> to vector<8x4xf32>
    %48 = arith.subf %44, %47 : vector<8x4xf32>
    %49 = math.exp %48 : vector<8x4xf32>
    %cst_18 = arith.constant dense<0.000000e+00> : vector<8xf32>
    %50 = vector.multi_reduction <add>, %49, %cst_18 [1] : vector<8x4xf32> to vector<8xf32>
    %51 = vector.shape_cast %50 : vector<8xf32> to vector<8x1xf32>
    %52 = math.log %51 : vector<8x1xf32>
    %53 = arith.addf %52, %46 : vector<8x1xf32>
    %54 = tpu.iota {dimensions = array<i32: 1>} : vector<8x4xi32>
    %55 = vector.broadcast %0 : vector<8x1xi32> to vector<8x4xi32>
    %56 = arith.cmpi eq, %54, %55 : vector<8x4xi32>
    %cst_19 = arith.constant 0.000000e+00 : f32
    %57 = vector.broadcast %cst_19 : f32 to vector<8x4xf32>
    %58 = arith.select %56, %44, %57 : vector<8x4xi1>, vector<8x4xf32>
    %cst_20 = arith.constant dense<0.000000e+00> : vector<8xf32>
    %59 = vector.multi_reduction <add>, %58, %cst_20 [1] : vector<8x4xf32> to vector<8xf32>
    %60 = vector.shape_cast %59 : vector<8xf32> to vector<8x1xf32>
    %61 = arith.subf %53, %60 : vector<8x1xf32>
    %cst_21 = arith.constant 1.000000e+00 : f32
    %62 = vector.broadcast %cst_21 : f32 to vector<8x1xf32>
    %63 = arith.mulf %62, %61 : vector<8x1xf32>
    %64 = arith.addf %43, %63 : vector<8x1xf32>
    %c0_22 = arith.constant 0 : index
    %c0_23 = arith.constant 0 : index
    %65 = vector.load %arg5[%c0_22, %c0_23] : memref<8x1xf32, #tpu.memory_space<vmem>>, vector<8x1xf32>
    tpu.vector_store %arg5[%c0_22, %c0_23], %64 {strides = array<i32>} : memref<8x1xf32, #tpu.memory_space<vmem>>, vector<8x1xf32>,
    return
  }
  func.func @transform_0(%arg0: i32) -> (i32, i32) {
    %c0_i32 = arith.constant 0 : i32
    %c0_i32_0 = arith.constant 0 : i32
    return %arg0, %c0_i32 : i32, i32
  }
  func.func @transform_1(%arg0: i32) -> (i32, i32) {
    %c0_i32 = arith.constant 0 : i32
    %c0_i32_0 = arith.constant 0 : i32
    return %arg0, %c0_i32 : i32, i32
  }
  func.func @transform_2(%arg0: i32) -> (i32, i32) {
    %c0_i32 = arith.constant 0 : i32
    %c0_i32_0 = arith.constant 0 : i32
    return %arg0, %c0_i32 : i32, i32
  }
  func.func @transform_3(%arg0: i32) -> (i32, i32) {
    %c0_i32 = arith.constant 0 : i32
    %c0_i32_0 = arith.constant 0 : i32
    return %arg0, %c0_i32 : i32, i32
  }
  func.func @transform_4(%arg0: i32) -> (i32, i32) {
    %c0_i32 = arith.constant 0 : i32
    %c0_i32_0 = arith.constant 0 : i32
    return %arg0, %c0_i32 : i32, i32
  }
}

</mosaic_0001>

<llo_original>
// kernel: tpu_custom_call.1
$region0: #{tpu_custom_call.1}
  #allocation0 [shape = 'u32[]', space=smem, size = 0x4, offset = 0x4, fixed_abs, tag = 'smem constant byte address 0x4 - core index']
  #allocation1 [shape = 'u32[144,128]{1,0:T(1,128)}', space=vmem, size = 0x12000, scoped, tag = 'internal scratch']
  %s0 = inlined_call_operand.vmem [shape: s32[8,1], index: 0, kind: input, shape index: {}]
  %s1 = inlined_call_operand.vmem [shape: f32[8,4], index: 1, kind: input, shape index: {}]
  %s2 = inlined_call_operand.vmem [shape: f32[8,4], index: 2, kind: input, shape index: {}]
  %s3 = inlined_call_operand.vmem [shape: f32[8,4], index: 3, kind: input, shape index: {}]
  %s4 = inlined_call_operand.vmem [shape: f32[8,1], index: 4, kind: output, shape index: {}]
  %s5 = sld [smem:[#allocation0]]
  $region26: #{tpu_custom_call.1} parent=0
    _
  %s7 = ssub.s32 1, %s5
  %s8 = scalar_select 0, %s7, %s5
  // Predicated region
  $region2: #{tpu_custom_call.1} parent=0 // pred_check
    _
  $region3: #{tpu_custom_call.1} parent=0 // pred_check_branch
    %10 = sbr.rel (0) target = $region5
  $region4: #{tpu_custom_call.1} parent=0 // pred_region
    _
  $region5: #{tpu_custom_call.1} parent=0 // pred_fallthru
    _
  // Predicated region
  $region6: #{tpu_custom_call.1} parent=0 // pred_check
    _
  $region7: #{tpu_custom_call.1} parent=0 // pred_check_branch
    %12 = sbr.rel (0) target = $region9
  $region8: #{tpu_custom_call.1} parent=0 // pred_region
    _
  $region9: #{tpu_custom_call.1} parent=0 // pred_fallthru
    _
  // Predicated region
  $region10: #{tpu_custom_call.1} parent=0 // pred_check
    _
  $region11: #{tpu_custom_call.1} parent=0 // pred_check_branch
    %14 = sbr.rel (0) target = $region13
  $region12: #{tpu_custom_call.1} parent=0 // pred_region
    _
  $region13: #{tpu_custom_call.1} parent=0 // pred_fallthru
    _
  // Predicated region
  $region14: #{tpu_custom_call.1} parent=0 // pred_check
    _
  $region15: #{tpu_custom_call.1} parent=0 // pred_check_branch
    %16 = sbr.rel (0) target = $region17
  $region16: #{tpu_custom_call.1} parent=0 // pred_region
    _
  $region17: #{tpu_custom_call.1} parent=0 // pred_fallthru
    _
  %v17 = vld [vmem:[%s0] sm:$0xff]
  %v18 = vld [vmem:[%s1] sm:$0xff]
  %vm19 = vcmask 31744
  %v20 = vsel %vm19, %v18, -inf
  %21 = vmax.xlane.f32.xlu0 %v20
  %v22 = vpop.xlane.xlu0 %21
  %v23 = vsub.f32 %v18, %v22
  %v24 = vmul.f32 %v23, 1.442695
  %v25 = vpow.pop %v24
  %v26 = vsel %vm19, %v25, 0.0
  %27 = vadd.xlane.f32.xlu0 %v26
  %v28 = vpop.xlane.xlu0 %27
  %v29 = vlog2.pop %v28
  %v30 = vmul.f32 %v29, 0.6931472
  %v31 = vadd.f32 %v30, %v22
  %v32 = vlaneseq
  %v33 = vand.u32 %v32, 127
  %34 = vset.pattern.permute.xlu0 0
  %35 = vperm.xlu0 %34, %v17
  %v36 = vpop.permute.xlu0 %35
  %vm37 = vcmp.eq.s32.totalorder %v33, %v36
  %v38 = vsel %vm37, %v18, 0.0
  %v39 = vsel %vm19, %v38, 0.0
  %40 = vadd.xlane.f32.xlu0 %v39
  %v41 = vpop.xlane.xlu0 %40
  %v42 = vsub.f32 %v31, %v41
  %v43 = vadd.f32 %v42, 0.0
  %v44 = vld [vmem:[%s2] sm:$0xff]
  %v45 = vsel %vm19, %v44, -inf
  %46 = vmax.xlane.f32.xlu0 %v45
  %v47 = vpop.xlane.xlu0 %46
  %v48 = vsub.f32 %v44, %v47
  %v49 = vmul.f32 %v48, 1.442695
  %v50 = vpow.pop %v49
  %v51 = vsel %vm19, %v50, 0.0
  %52 = vadd.xlane.f32.xlu0 %v51
  %v53 = vpop.xlane.xlu0 %52
  %v54 = vlog2.pop %v53
  %v55 = vmul.f32 %v54, 0.6931472
  %v56 = vadd.f32 %v55, %v47
  %v57 = vsel %vm37, %v44, 0.0
  %v58 = vsel %vm19, %v57, 0.0
  %59 = vadd.xlane.f32.xlu0 %v58
  %v60 = vpop.xlane.xlu0 %59
  %v61 = vsub.f32 %v56, %v60
  %v62 = vadd.f32 %v43, %v61
  %v63 = vld [vmem:[%s3] sm:$0xff]
  %v64 = vsel %vm19, %v63, -inf
  %65 = vmax.xlane.f32.xlu0 %v64
  %v66 = vpop.xlane.xlu0 %65
  %v67 = vsub.f32 %v63, %v66
  %v68 = vmul.f32 %v67, 1.442695
  %v69 = vpow.pop %v68
  %v70 = vsel %vm19, %v69, 0.0
  %71 = vadd.xlane.f32.xlu0 %v70
  %v72 = vpop.xlane.xlu0 %71
  %v73 = vlog2.pop %v72
  %v74 = vmul.f32 %v73, 0.6931472
  %v75 = vadd.f32 %v74, %v66
  %v76 = vsel %vm37, %v63, 0.0
  %v77 = vsel %vm19, %v76, 0.0
  %78 = vadd.xlane.f32.xlu0 %v77
  %v79 = vpop.xlane.xlu0 %78
  %v80 = vsub.f32 %v75, %v79
  %v81 = vadd.f32 %v62, %v80
  %vm82 = vcmask 7168
  %83 = vst.msk [vmem:[%s4] sm:$0xff] %vm82, %v81
  // Predicated region
  $region18: #{tpu_custom_call.1} parent=0 // pred_check
    _
  $region19: #{tpu_custom_call.1} parent=0 // pred_check_branch
    %85 = sbr.rel (0) target = $region21
  $region20: #{tpu_custom_call.1} parent=0 // pred_region
    _
  $region21: #{tpu_custom_call.1} parent=0 // pred_fallthru
    _
  // Predicated region
  $region22: #{tpu_custom_call.1} parent=0 // pred_check
    _
  $region23: #{tpu_custom_call.1} parent=0 // pred_check_branch
    %87 = sbr.rel (0) target = $region25
  $region24: #{tpu_custom_call.1} parent=0 // pred_region
    _
  $region25: #{tpu_custom_call.1} parent=0 // pred_fallthru
    _

</llo_original>
